<compile_context>
chip_gen: v7x
topology: tpu7x:2x2x1
jax: 0.10.0
libtpu: 0.0.40
codegen_flags: <defaults>
</compile_context>

<pallas_src>
import jax
import jax.numpy as jnp
from jax import lax
from jax.experimental import pallas as pl
from jax.experimental.pallas import tpu as pltpu


# ----------------------------- Pallas kernel ------------------------------ #

def _lstm_utterance_kernel(xg_ref, mask_ref, whh_ref, out_ref):
    """Fused bidirectional masked LSTM recurrence.

    xg_ref:   (T, B, 8H) precomputed input-side gates, fused column layout
              [i_f,i_b,f_f,f_b,o_f,o_b,g_f,g_b]; bwd half already time-reversed.
    mask_ref: (T, B, 2H) pre-broadcast {0,1} mask (fwd lanes 0:H, bwd H:2H).
    whh_ref:  (2H, 8H) block-diagonal recurrent weights (fwd rows 0:H, bwd H:2H).
    out_ref:  (B, 2H) = cat(forward final h, backward final h).
    """
    T = xg_ref.shape[0]
    B, L = out_ref.shape                  # L = 2H (both directions packed)

    whh = whh_ref[...]                    # load recurrent weights once
    zeros = jnp.zeros((B, L), jnp.float32)

    def body(s, carry):
        h, c = carry                      # (B, 2H) each, [fwd | bwd] lanes
        # one full 128-lane gate tensor for BOTH directions
        gates = xg_ref[s] + jnp.dot(h, whh, preferred_element_type=jnp.float32)
        sg = jax.nn.sigmoid(gates[:, :3 * L])      # lanes 0:96  -> i, f, o
        i = sg[:, :L]
        f = sg[:, L:2 * L]
        o = sg[:, 2 * L:3 * L]
        g = jnp.tanh(gates[:, 3 * L:])             # lanes 96:128 -> g
        c_new = f * c + i * g
        h_new = o * jnp.tanh(c_new)
        # SequenceBatch gated update; mask is strictly {0,1}, so the hard
        # select is equivalent to the reference's linear blend.
        keep = mask_ref[s] > 0.0
        return jnp.where(keep, h_new, h), jnp.where(keep, c_new, c)

    h_final, _ = lax.fori_loop(0, T, body, (zeros, zeros), unroll=True)
    out_ref[...] = h_final                # == cat(fwd final h, bwd final h)


# ------------------------------ JAX wrapper -------------------------------- #

def _permute_gates(w, H):
    """Reorder gate blocks from PyTorch LSTMCell order [i,f,g,o] to [i,f,o,g]."""
    i = w[..., 0:H]
    f = w[..., H:2 * H]
    g = w[..., 2 * H:3 * H]
    o = w[..., 3 * H:4 * H]
    return jnp.concatenate([i, f, o, g], axis=-1)


def lstm_utterance_embedder(token_indices, mask, params):
    """token_indices: (B, T) int32, mask: (B, T) float -> (B, lstm_dim)."""
    emb_table = params["emb_table"]
    B, T = token_indices.shape
    H = params["whh_f"].shape[0]
    L = 2 * H

    # Pad batch to a sublane multiple / batch-block multiple. Padded rows are
    # fully masked, so their LSTM states stay zero; sliced off afterwards.
    SUB = 8
    if B <= 256:
        B_pad = ((B + SUB - 1) // SUB) * SUB
        B_blk = B_pad
    else:
        B_blk = 256
        B_pad = ((B + B_blk - 1) // B_blk) * B_blk

    tok = jnp.zeros((B_pad, T), jnp.int32).at[:B, :].set(token_indices)
    msk = jnp.zeros((B_pad, T), jnp.float32).at[:B, :].set(mask.astype(jnp.float32))

    # --- fold input projection into the embedding table (wrapper-side) -----
    # TODO(synk): string tokenization / vocab lookup of the original module is
    # host-side Python; token indices + mask are built directly.
    P_f = _permute_gates(emb_table @ params["wih_f"] + params["b_f"], H)  # (V,4H)
    P_b = _permute_gates(emb_table @ params["wih_b"] + params["b_b"], H)  # (V,4H)
    xg_f = jnp.take(P_f, tok, axis=0)                     # (B_pad, T, 4H)
    xg_b = jnp.take(P_b, tok, axis=0)                     # (B_pad, T, 4H)
    xg_f_tm = jnp.transpose(xg_f, (1, 0, 2))              # (T, B_pad, 4H)
    xg_b_tm = jnp.transpose(xg_b, (1, 0, 2))[::-1]        # bwd: time-reversed

    # Interleave per-gate so both directions share contiguous 32-lane slabs:
    # fused columns = [i_f,i_b, f_f,f_b, o_f,o_b, g_f,g_b]  -> 8H = 128 lanes.
    xg_fused = jnp.stack(
        [xg_f_tm.reshape(T, B_pad, 4, H),
         xg_b_tm.reshape(T, B_pad, 4, H)], axis=3).reshape(T, B_pad, 8 * H)

    # Pre-broadcast mask: fwd mask (time s) in lanes 0:H, bwd mask (time
    # T-1-s) in lanes H:2H -> plain full-width select in the kernel.
    msk_tm = jnp.transpose(msk, (1, 0))                   # (T, B_pad)
    m_f = jnp.broadcast_to(msk_tm[:, :, None], (T, B_pad, H))
    m_b = jnp.broadcast_to(msk_tm[::-1][:, :, None], (T, B_pad, H))
    mask_fused = jnp.concatenate([m_f, m_b], axis=-1)     # (T, B_pad, 2H)

    # Block-diagonal recurrent weights matching the fused column layout:
    # rows 0:H (h_fwd) feed only the *_f columns, rows H:2H the *_b columns.
    wf = _permute_gates(params["whh_f"], H).reshape(H, 4, H)
    wb = _permute_gates(params["whh_b"], H).reshape(H, 4, H)
    z = jnp.zeros_like(wf)
    whh_fused = jnp.concatenate(
        [jnp.stack([wf, z], axis=2).reshape(H, 8 * H),
         jnp.stack([z, wb], axis=2).reshape(H, 8 * H)], axis=0)   # (2H, 8H)

    out = pl.pallas_call(
        _lstm_utterance_kernel,
        out_shape=jax.ShapeDtypeStruct((B_pad, L), jnp.float32),
        grid=(B_pad // B_blk,),
        in_specs=[
            pl.BlockSpec((T, B_blk, 8 * H), lambda b: (0, b, 0)),
            pl.BlockSpec((T, B_blk, L), lambda b: (0, b, 0)),
            pl.BlockSpec((2 * H, 8 * H), lambda b: (0, 0)),
        ],
        out_specs=pl.BlockSpec((B_blk, L), lambda b: (b, 0)),
        compiler_params=pltpu.CompilerParams(
            dimension_semantics=("parallel",)),
    )(xg_fused, mask_fused, whh_fused)
    return out[:B]


# --------------------------- deterministic params --------------------------- #

def init_params(key, vocab_size, embed_dim, lstm_dim):
    assert lstm_dim % 2 == 0
    H = lstm_dim // 2
    ks = jax.random.split(key, 7)
    rnd = lambda k, shape: jax.random.normal(k, shape, jnp.float32) * 0.1
    return {
        "emb_table": rnd(ks[0], (vocab_size, embed_dim)),
        "wih_f": rnd(ks[1], (embed_dim, 4 * H)),
        "whh_f": rnd(ks[2], (H, 4 * H)),
        "b_f":   rnd(ks[3], (1, 4 * H)),
        "wih_b": rnd(ks[4], (embed_dim, 4 * H)),
        "whh_b": rnd(ks[5], (H, 4 * H)),
        "b_b":   rnd(ks[6], (1, 4 * H)),
    }


# ------------------------------ JAX reference ------------------------------ #

def reference_forward(token_indices, mask, params):
    """Plain-JAX LSTMUtteranceEmbedder forward (PyTorch gate order i,f,g,o)."""
    emb = jnp.take(params["emb_table"], token_indices, axis=0)       # (B, T, E)
    B, T, _E = emb.shape
    H = params["whh_f"].shape[0]
    emb_tm = jnp.transpose(emb, (1, 0, 2))
    mask_tm = jnp.transpose(mask.astype(jnp.float32), (1, 0))[:, :, None]

    def cell(x, m, h, c, wih, whh, b):
        g = x @ wih + h @ whh + b
        i = jax.nn.sigmoid(g[:, :H])
        f = jax.nn.sigmoid(g[:, H:2 * H])
        gg = jnp.tanh(g[:, 2 * H:3 * H])
        o = jax.nn.sigmoid(g[:, 3 * H:])
        c_n = f * c + i * gg
        h_n = o * jnp.tanh(c_n)
        return m * h_n + (1 - m) * h, m * c_n + (1 - m) * c

    h = c = jnp.zeros((B, H), jnp.float32)
    for t in range(T):
        h, c = cell(emb_tm[t], mask_tm[t], h, c,
                    params["wih_f"], params["whh_f"], params["b_f"])
    hf_final = h

    h = c = jnp.zeros((B, H), jnp.float32)
    for t in range(T - 1, -1, -1):
        h, c = cell(emb_tm[t], mask_tm[t], h, c,
                    params["wih_b"], params["whh_b"], params["b_b"])
    hb_final = h

    return jnp.concatenate([hf_final, hb_final], axis=-1)


# ---------------------------------- main ----------------------------------- #

if __name__ == "__main__":
    B, max_words = 2, 7
    T = max_words + 1                      # +EOS; SequenceBatch pads to longest
    vocab_size, embed_dim, lstm_dim = 50, 32, 32
    EOS_ID, PAD_ID = 2, 0

    key = jax.random.PRNGKey(0)
    kp, kt = jax.random.split(key)
    params = init_params(kp, vocab_size, embed_dim, lstm_dim)

    # Build token indices + mask directly (string tokenization is host-side).
    lengths = [5, 7]
    rand_tokens = jax.random.randint(kt, (B, T), 3, vocab_size, dtype=jnp.int32)
    token_rows, mask_rows = [], []
    for b in range(B):
        n = min(lengths[b], max_words)
        row = [int(x) for x in rand_tokens[b, :n]] + [EOS_ID]
        row = row + [PAD_ID] * (T - len(row))
        token_rows.append(row)
        mask_rows.append([1.0] * (n + 1) + [0.0] * (T - n - 1))
    token_indices = jnp.array(token_rows, jnp.int32)
    mask = jnp.array(mask_rows, jnp.float32)

    out = lstm_utterance_embedder(token_indices, mask, params)
    out = jax.block_until_ready(out)

    ref = reference_forward(token_indices, mask, params)
    assert out.shape == (B, lstm_dim)
    assert bool(jnp.all(jnp.isfinite(out)))
    assert float(jnp.max(jnp.abs(out - ref))) < 5e-3, "mismatch vs JAX reference"
    print("KERNEL_OK")
</pallas_src>

<mosaic_0001>
module attributes {stable_mosaic.version = 11 : i64} {
  func.func @_lstm_utterance_kernel(%arg0: i32, %arg1: memref<8x8x128xf32, #tpu.memory_space<vmem>>, %arg2: memref<8x8x32xf32, #tpu.memory_space<vmem>>, %arg3: memref<32x128xf32, #tpu.memory_space<vmem>>, %arg4: memref<8x32xf32, #tpu.memory_space<vmem>>) attributes {dimension_semantics = [#tpu.dimension_semantics<parallel>], iteration_bounds = array<i64: 1>, scalar_prefetch = 0 : i64, scratch_operands = 0 : i64, tpu.core_type = #tpu.core_type<tc>, window_params = [{transform_indices = @transform_0, window_bounds = array<i64: 8, 8, 128>}, {transform_indices = @transform_1, window_bounds = array<i64: 8, 8, 32>}, {pipeline_mode = #tpu.pipeline_mode<synchronous>, transform_indices = @transform_2, window_bounds = array<i64: 32, 128>}, {transform_indices = @transform_3, window_bounds = array<i64: 8, 32>}]} {
    %c0 = arith.constant 0 : index
    %c0_0 = arith.constant 0 : index
    %0 = vector.load %arg3[%c0, %c0_0] : memref<32x128xf32, #tpu.memory_space<vmem>>, vector<32x128xf32>
    %cst = arith.constant 0.000000e+00 : f32
    %1 = vector.broadcast %cst : f32 to vector<8x32xf32>
    %c0_i32 = arith.constant 0 : i32
    %2 = arith.index_cast %c0_i32 : i32 to index
    %c0_1 = arith.constant 0 : index
    %c0_2 = arith.constant 0 : index
    %3 = vector.load %arg1[%2, %c0_1, %c0_2] : memref<8x8x128xf32, #tpu.memory_space<vmem>>, vector<1x8x128xf32>
    %4 = vector.shape_cast %3 : vector<1x8x128xf32> to vector<8x128xf32>
    %cst_3 = arith.constant dense<0.000000e+00> : vector<8x128xf32>
    %5 = tpu.matmul %1, %0, %cst_3 {dimension_numbers = #tpu.dot_dimension_numbers<[1], [0], [0], [1], [0, 0, 1, 1], [], []>} : vector<8x32xf32>, vector<32x128xf32>, vector<8x128xf32> -> vector<8x128xf32>
    %6 = arith.addf %4, %5 : vector<8x128xf32>
    %7 = vector.extract_strided_slice %6 {offsets = [0, 0], sizes = [8, 96], strides = [1, 1]} : vector<8x128xf32> to vector<8x96xf32>
    %8 = arith.negf %7 : vector<8x96xf32>
    %9 = math.exp %8 : vector<8x96xf32>
    %cst_4 = arith.constant 1.000000e+00 : f32
    %10 = vector.broadcast %cst_4 : f32 to vector<8x96xf32>
    %11 = arith.addf %10, %9 : vector<8x96xf32>
    %12 = arith.divf %10, %11 : vector<8x96xf32>
    %13 = vector.extract_strided_slice %12 {offsets = [0, 0], sizes = [8, 32], strides = [1, 1]} : vector<8x96xf32> to vector<8x32xf32>
    %14 = vector.extract_strided_slice %12 {offsets = [0, 32], sizes = [8, 32], strides = [1, 1]} : vector<8x96xf32> to vector<8x32xf32>
    %15 = vector.extract_strided_slice %12 {offsets = [0, 64], sizes = [8, 32], strides = [1, 1]} : vector<8x96xf32> to vector<8x32xf32>
    %16 = vector.extract_strided_slice %6 {offsets = [0, 96], sizes = [8, 32], strides = [1, 1]} : vector<8x128xf32> to vector<8x32xf32>
    %17 = math.tanh %16 : vector<8x32xf32>
    %18 = arith.mulf %14, %1 : vector<8x32xf32>
    %19 = arith.mulf %13, %17 : vector<8x32xf32>
    %20 = arith.addf %18, %19 : vector<8x32xf32>
    %21 = math.tanh %20 : vector<8x32xf32>
    %22 = arith.mulf %15, %21 : vector<8x32xf32>
    %23 = arith.index_cast %c0_i32 : i32 to index
    %c0_5 = arith.constant 0 : index
    %c0_6 = arith.constant 0 : index
    %24 = vector.load %arg2[%23, %c0_5, %c0_6] : memref<8x8x32xf32, #tpu.memory_space<vmem>>, vector<1x8x32xf32>
    %25 = vector.shape_cast %24 : vector<1x8x32xf32> to vector<8x32xf32>
    %cst_7 = arith.constant 0.000000e+00 : f32
    %26 = vector.broadcast %cst_7 : f32 to vector<8x32xf32>
    %27 = arith.cmpf ogt, %25, %26 : vector<8x32xf32>
    %28 = arith.select %27, %22, %1 : vector<8x32xi1>, vector<8x32xf32>
    %29 = arith.select %27, %20, %1 : vector<8x32xi1>, vector<8x32xf32>
    %c1_i32 = arith.constant 1 : i32
    %30 = arith.index_cast %c1_i32 : i32 to index
    %c0_8 = arith.constant 0 : index
    %c0_9 = arith.constant 0 : index
    %31 = vector.load %arg1[%30, %c0_8, %c0_9] : memref<8x8x128xf32, #tpu.memory_space<vmem>>, vector<1x8x128xf32>
    %32 = vector.shape_cast %31 : vector<1x8x128xf32> to vector<8x128xf32>
    %cst_10 = arith.constant dense<0.000000e+00> : vector<8x128xf32>
    %33 = tpu.matmul %28, %0, %cst_10 {dimension_numbers = #tpu.dot_dimension_numbers<[1], [0], [0], [1], [0, 0, 1, 1], [], []>} : vector<8x32xf32>, vector<32x128xf32>, vector<8x128xf32> -> vector<8x128xf32>
    %34 = arith.addf %32, %33 : vector<8x128xf32>
    %35 = vector.extract_strided_slice %34 {offsets = [0, 0], sizes = [8, 96], strides = [1, 1]} : vector<8x128xf32> to vector<8x96xf32>
    %36 = arith.negf %35 : vector<8x96xf32>
    %37 = math.exp %36 : vector<8x96xf32>
    %cst_11 = arith.constant 1.000000e+00 : f32
    %38 = vector.broadcast %cst_11 : f32 to vector<8x96xf32>
    %39 = arith.addf %38, %37 : vector<8x96xf32>
    %40 = arith.divf %38, %39 : vector<8x96xf32>
    %41 = vector.extract_strided_slice %40 {offsets = [0, 0], sizes = [8, 32], strides = [1, 1]} : vector<8x96xf32> to vector<8x32xf32>
    %42 = vector.extract_strided_slice %40 {offsets = [0, 32], sizes = [8, 32], strides = [1, 1]} : vector<8x96xf32> to vector<8x32xf32>
    %43 = vector.extract_strided_slice %40 {offsets = [0, 64], sizes = [8, 32], strides = [1, 1]} : vector<8x96xf32> to vector<8x32xf32>
    %44 = vector.extract_strided_slice %34 {offsets = [0, 96], sizes = [8, 32], strides = [1, 1]} : vector<8x128xf32> to vector<8x32xf32>
    %45 = math.tanh %44 : vector<8x32xf32>
    %46 = arith.mulf %42, %29 : vector<8x32xf32>
    %47 = arith.mulf %41, %45 : vector<8x32xf32>
    %48 = arith.addf %46, %47 : vector<8x32xf32>
    %49 = math.tanh %48 : vector<8x32xf32>
    %50 = arith.mulf %43, %49 : vector<8x32xf32>
    %51 = arith.index_cast %c1_i32 : i32 to index
    %c0_12 = arith.constant 0 : index
    %c0_13 = arith.constant 0 : index
    %52 = vector.load %arg2[%51, %c0_12, %c0_13] : memref<8x8x32xf32, #tpu.memory_space<vmem>>, vector<1x8x32xf32>
    %53 = vector.shape_cast %52 : vector<1x8x32xf32> to vector<8x32xf32>
    %cst_14 = arith.constant 0.000000e+00 : f32
    %54 = vector.broadcast %cst_14 : f32 to vector<8x32xf32>
    %55 = arith.cmpf ogt, %53, %54 : vector<8x32xf32>
    %56 = arith.select %55, %50, %28 : vector<8x32xi1>, vector<8x32xf32>
    %57 = arith.select %55, %48, %29 : vector<8x32xi1>, vector<8x32xf32>
    %c2_i32 = arith.constant 2 : i32
    %58 = arith.index_cast %c2_i32 : i32 to index
    %c0_15 = arith.constant 0 : index
    %c0_16 = arith.constant 0 : index
    %59 = vector.load %arg1[%58, %c0_15, %c0_16] : memref<8x8x128xf32, #tpu.memory_space<vmem>>, vector<1x8x128xf32>
    %60 = vector.shape_cast %59 : vector<1x8x128xf32> to vector<8x128xf32>
    %cst_17 = arith.constant dense<0.000000e+00> : vector<8x128xf32>
    %61 = tpu.matmul %56, %0, %cst_17 {dimension_numbers = #tpu.dot_dimension_numbers<[1], [0], [0], [1], [0, 0, 1, 1], [], []>} : vector<8x32xf32>, vector<32x128xf32>, vector<8x128xf32> -> vector<8x128xf32>
    %62 = arith.addf %60, %61 : vector<8x128xf32>
    %63 = vector.extract_strided_slice %62 {offsets = [0, 0], sizes = [8, 96], strides = [1, 1]} : vector<8x128xf32> to vector<8x96xf32>
    %64 = arith.negf %63 : vector<8x96xf32>
    %65 = math.exp %64 : vector<8x96xf32>
    %cst_18 = arith.constant 1.000000e+00 : f32
    %66 = vector.broadcast %cst_18 : f32 to vector<8x96xf32>
    %67 = arith.addf %66, %65 : vector<8x96xf32>
    %68 = arith.divf %66, %67 : vector<8x96xf32>
    %69 = vector.extract_strided_slice %68 {offsets = [0, 0], sizes = [8, 32], strides = [1, 1]} : vector<8x96xf32> to vector<8x32xf32>
    %70 = vector.extract_strided_slice %68 {offsets = [0, 32], sizes = [8, 32], strides = [1, 1]} : vector<8x96xf32> to vector<8x32xf32>
    %71 = vector.extract_strided_slice %68 {offsets = [0, 64], sizes = [8, 32], strides = [1, 1]} : vector<8x96xf32> to vector<8x32xf32>
    %72 = vector.extract_strided_slice %62 {offsets = [0, 96], sizes = [8, 32], strides = [1, 1]} : vector<8x128xf32> to vector<8x32xf32>
    %73 = math.tanh %72 : vector<8x32xf32>
    %74 = arith.mulf %70, %57 : vector<8x32xf32>
    %75 = arith.mulf %69, %73 : vector<8x32xf32>
    %76 = arith.addf %74, %75 : vector<8x32xf32>
    %77 = math.tanh %76 : vector<8x32xf32>
    %78 = arith.mulf %71, %77 : vector<8x32xf32>
    %79 = arith.index_cast %c2_i32 : i32 to index
    %c0_19 = arith.constant 0 : index
    %c0_20 = arith.constant 0 : index
    %80 = vector.load %arg2[%79, %c0_19, %c0_20] : memref<8x8x32xf32, #tpu.memory_space<vmem>>, vector<1x8x32xf32>
    %81 = vector.shape_cast %80 : vector<1x8x32xf32> to vector<8x32xf32>
    %cst_21 = arith.constant 0.000000e+00 : f32
    %82 = vector.broadcast %cst_21 : f32 to vector<8x32xf32>
    %83 = arith.cmpf ogt, %81, %82 : vector<8x32xf32>
    %84 = arith.select %83, %78, %56 : vector<8x32xi1>, vector<8x32xf32>
    %85 = arith.select %83, %76, %57 : vector<8x32xi1>, vector<8x32xf32>
    %c3_i32 = arith.constant 3 : i32
    %86 = arith.index_cast %c3_i32 : i32 to index
    %c0_22 = arith.constant 0 : index
    %c0_23 = arith.constant 0 : index
    %87 = vector.load %arg1[%86, %c0_22, %c0_23] : memref<8x8x128xf32, #tpu.memory_space<vmem>>, vector<1x8x128xf32>
    %88 = vector.shape_cast %87 : vector<1x8x128xf32> to vector<8x128xf32>
    %cst_24 = arith.constant dense<0.000000e+00> : vector<8x128xf32>
    %89 = tpu.matmul %84, %0, %cst_24 {dimension_numbers = #tpu.dot_dimension_numbers<[1], [0], [0], [1], [0, 0, 1, 1], [], []>} : vector<8x32xf32>, vector<32x128xf32>, vector<8x128xf32> -> vector<8x128xf32>
    %90 = arith.addf %88, %89 : vector<8x128xf32>
    %91 = vector.extract_strided_slice %90 {offsets = [0, 0], sizes = [8, 96], strides = [1, 1]} : vector<8x128xf32> to vector<8x96xf32>
    %92 = arith.negf %91 : vector<8x96xf32>
    %93 = math.exp %92 : vector<8x96xf32>
    %cst_25 = arith.constant 1.000000e+00 : f32
    %94 = vector.broadcast %cst_25 : f32 to vector<8x96xf32>
    %95 = arith.addf %94, %93 : vector<8x96xf32>
    %96 = arith.divf %94, %95 : vector<8x96xf32>
    %97 = vector.extract_strided_slice %96 {offsets = [0, 0], sizes = [8, 32], strides = [1, 1]} : vector<8x96xf32> to vector<8x32xf32>
    %98 = vector.extract_strided_slice %96 {offsets = [0, 32], sizes = [8, 32], strides = [1, 1]} : vector<8x96xf32> to vector<8x32xf32>
    %99 = vector.extract_strided_slice %96 {offsets = [0, 64], sizes = [8, 32], strides = [1, 1]} : vector<8x96xf32> to vector<8x32xf32>
    %100 = vector.extract_strided_slice %90 {offsets = [0, 96], sizes = [8, 32], strides = [1, 1]} : vector<8x128xf32> to vector<8x32xf32>
    %101 = math.tanh %100 : vector<8x32xf32>
    %102 = arith.mulf %98, %85 : vector<8x32xf32>
    %103 = arith.mulf %97, %101 : vector<8x32xf32>
    %104 = arith.addf %102, %103 : vector<8x32xf32>
    %105 = math.tanh %104 : vector<8x32xf32>
    %106 = arith.mulf %99, %105 : vector<8x32xf32>
    %107 = arith.index_cast %c3_i32 : i32 to index
    %c0_26 = arith.constant 0 : index
    %c0_27 = arith.constant 0 : index
    %108 = vector.load %arg2[%107, %c0_26, %c0_27] : memref<8x8x32xf32, #tpu.memory_space<vmem>>, vector<1x8x32xf32>
    %109 = vector.shape_cast %108 : vector<1x8x32xf32> to vector<8x32xf32>
    %cst_28 = arith.constant 0.000000e+00 : f32
    %110 = vector.broadcast %cst_28 : f32 to vector<8x32xf32>
    %111 = arith.cmpf ogt, %109, %110 : vector<8x32xf32>
    %112 = arith.select %111, %106, %84 : vector<8x32xi1>, vector<8x32xf32>
    %113 = arith.select %111, %104, %85 : vector<8x32xi1>, vector<8x32xf32>
    %c4_i32 = arith.constant 4 : i32
    %114 = arith.index_cast %c4_i32 : i32 to index
    %c0_29 = arith.constant 0 : index
    %c0_30 = arith.constant 0 : index
    %115 = vector.load %arg1[%114, %c0_29, %c0_30] : memref<8x8x128xf32, #tpu.memory_space<vmem>>, vector<1x8x128xf32>
    %116 = vector.shape_cast %115 : vector<1x8x128xf32> to vector<8x128xf32>
    %cst_31 = arith.constant dense<0.000000e+00> : vector<8x128xf32>
    %117 = tpu.matmul %112, %0, %cst_31 {dimension_numbers = #tpu.dot_dimension_numbers<[1], [0], [0], [1], [0, 0, 1, 1], [], []>} : vector<8x32xf32>, vector<32x128xf32>, vector<8x128xf32> -> vector<8x128xf32>
    %118 = arith.addf %116, %117 : vector<8x128xf32>
    %119 = vector.extract_strided_slice %118 {offsets = [0, 0], sizes = [8, 96], strides = [1, 1]} : vector<8x128xf32> to vector<8x96xf32>
    %120 = arith.negf %119 : vector<8x96xf32>
    %121 = math.exp %120 : vector<8x96xf32>
    %cst_32 = arith.constant 1.000000e+00 : f32
    %122 = vector.broadcast %cst_32 : f32 to vector<8x96xf32>
    %123 = arith.addf %122, %121 : vector<8x96xf32>
    %124 = arith.divf %122, %123 : vector<8x96xf32>
    %125 = vector.extract_strided_slice %124 {offsets = [0, 0], sizes = [8, 32], strides = [1, 1]} : vector<8x96xf32> to vector<8x32xf32>
    %126 = vector.extract_strided_slice %124 {offsets = [0, 32], sizes = [8, 32], strides = [1, 1]} : vector<8x96xf32> to vector<8x32xf32>
    %127 = vector.extract_strided_slice %124 {offsets = [0, 64], sizes = [8, 32], strides = [1, 1]} : vector<8x96xf32> to vector<8x32xf32>
    %128 = vector.extract_strided_slice %118 {offsets = [0, 96], sizes = [8, 32], strides = [1, 1]} : vector<8x128xf32> to vector<8x32xf32>
    %129 = math.tanh %128 : vector<8x32xf32>
    %130 = arith.mulf %126, %113 : vector<8x32xf32>
    %131 = arith.mulf %125, %129 : vector<8x32xf32>
    %132 = arith.addf %130, %131 : vector<8x32xf32>
    %133 = math.tanh %132 : vector<8x32xf32>
    %134 = arith.mulf %127, %133 : vector<8x32xf32>
    %135 = arith.index_cast %c4_i32 : i32 to index
    %c0_33 = arith.constant 0 : index
    %c0_34 = arith.constant 0 : index
    %136 = vector.load %arg2[%135, %c0_33, %c0_34] : memref<8x8x32xf32, #tpu.memory_space<vmem>>, vector<1x8x32xf32>
    %137 = vector.shape_cast %136 : vector<1x8x32xf32> to vector<8x32xf32>
    %cst_35 = arith.constant 0.000000e+00 : f32
    %138 = vector.broadcast %cst_35 : f32 to vector<8x32xf32>
    %139 = arith.cmpf ogt, %137, %138 : vector<8x32xf32>
    %140 = arith.select %139, %134, %112 : vector<8x32xi1>, vector<8x32xf32>
    %141 = arith.select %139, %132, %113 : vector<8x32xi1>, vector<8x32xf32>
    %c5_i32 = arith.constant 5 : i32
    %142 = arith.index_cast %c5_i32 : i32 to index
    %c0_36 = arith.constant 0 : index
    %c0_37 = arith.constant 0 : index
    %143 = vector.load %arg1[%142, %c0_36, %c0_37] : memref<8x8x128xf32, #tpu.memory_space<vmem>>, vector<1x8x128xf32>
    %144 = vector.shape_cast %143 : vector<1x8x128xf32> to vector<8x128xf32>
    %cst_38 = arith.constant dense<0.000000e+00> : vector<8x128xf32>
    %145 = tpu.matmul %140, %0, %cst_38 {dimension_numbers = #tpu.dot_dimension_numbers<[1], [0], [0], [1], [0, 0, 1, 1], [], []>} : vector<8x32xf32>, vector<32x128xf32>, vector<8x128xf32> -> vector<8x128xf32>
    %146 = arith.addf %144, %145 : vector<8x128xf32>
    %147 = vector.extract_strided_slice %146 {offsets = [0, 0], sizes = [8, 96], strides = [1, 1]} : vector<8x128xf32> to vector<8x96xf32>
    %148 = arith.negf %147 : vector<8x96xf32>
    %149 = math.exp %148 : vector<8x96xf32>
    %cst_39 = arith.constant 1.000000e+00 : f32
    %150 = vector.broadcast %cst_39 : f32 to vector<8x96xf32>
    %151 = arith.addf %150, %149 : vector<8x96xf32>
    %152 = arith.divf %150, %151 : vector<8x96xf32>
    %153 = vector.extract_strided_slice %152 {offsets = [0, 0], sizes = [8, 32], strides = [1, 1]} : vector<8x96xf32> to vector<8x32xf32>
    %154 = vector.extract_strided_slice %152 {offsets = [0, 32], sizes = [8, 32], strides = [1, 1]} : vector<8x96xf32> to vector<8x32xf32>
    %155 = vector.extract_strided_slice %152 {offsets = [0, 64], sizes = [8, 32], strides = [1, 1]} : vector<8x96xf32> to vector<8x32xf32>
    %156 = vector.extract_strided_slice %146 {offsets = [0, 96], sizes = [8, 32], strides = [1, 1]} : vector<8x128xf32> to vector<8x32xf32>
    %157 = math.tanh %156 : vector<8x32xf32>
    %158 = arith.mulf %154, %141 : vector<8x32xf32>
    %159 = arith.mulf %153, %157 : vector<8x32xf32>
    %160 = arith.addf %158, %159 : vector<8x32xf32>
    %161 = math.tanh %160 : vector<8x32xf32>
    %162 = arith.mulf %155, %161 : vector<8x32xf32>
    %163 = arith.index_cast %c5_i32 : i32 to index
    %c0_40 = arith.constant 0 : index
    %c0_41 = arith.constant 0 : index
    %164 = vector.load %arg2[%163, %c0_40, %c0_41] : memref<8x8x32xf32, #tpu.memory_space<vmem>>, vector<1x8x32xf32>
    %165 = vector.shape_cast %164 : vector<1x8x32xf32> to vector<8x32xf32>
    %cst_42 = arith.constant 0.000000e+00 : f32
    %166 = vector.broadcast %cst_42 : f32 to vector<8x32xf32>
    %167 = arith.cmpf ogt, %165, %166 : vector<8x32xf32>
    %168 = arith.select %167, %162, %140 : vector<8x32xi1>, vector<8x32xf32>
    %169 = arith.select %167, %160, %141 : vector<8x32xi1>, vector<8x32xf32>
    %c6_i32 = arith.constant 6 : i32
    %170 = arith.index_cast %c6_i32 : i32 to index
    %c0_43 = arith.constant 0 : index
    %c0_44 = arith.constant 0 : index
    %171 = vector.load %arg1[%170, %c0_43, %c0_44] : memref<8x8x128xf32, #tpu.memory_space<vmem>>, vector<1x8x128xf32>
    %172 = vector.shape_cast %171 : vector<1x8x128xf32> to vector<8x128xf32>
    %cst_45 = arith.constant dense<0.000000e+00> : vector<8x128xf32>
    %173 = tpu.matmul %168, %0, %cst_45 {dimension_numbers = #tpu.dot_dimension_numbers<[1], [0], [0], [1], [0, 0, 1, 1], [], []>} : vector<8x32xf32>, vector<32x128xf32>, vector<8x128xf32> -> vector<8x128xf32>
    %174 = arith.addf %172, %173 : vector<8x128xf32>
    %175 = vector.extract_strided_slice %174 {offsets = [0, 0], sizes = [8, 96], strides = [1, 1]} : vector<8x128xf32> to vector<8x96xf32>
    %176 = arith.negf %175 : vector<8x96xf32>
    %177 = math.exp %176 : vector<8x96xf32>
    %cst_46 = arith.constant 1.000000e+00 : f32
    %178 = vector.broadcast %cst_46 : f32 to vector<8x96xf32>
    %179 = arith.addf %178, %177 : vector<8x96xf32>
    %180 = arith.divf %178, %179 : vector<8x96xf32>
    %181 = vector.extract_strided_slice %180 {offsets = [0, 0], sizes = [8, 32], strides = [1, 1]} : vector<8x96xf32> to vector<8x32xf32>
    %182 = vector.extract_strided_slice %180 {offsets = [0, 32], sizes = [8, 32], strides = [1, 1]} : vector<8x96xf32> to vector<8x32xf32>
    %183 = vector.extract_strided_slice %180 {offsets = [0, 64], sizes = [8, 32], strides = [1, 1]} : vector<8x96xf32> to vector<8x32xf32>
    %184 = vector.extract_strided_slice %174 {offsets = [0, 96], sizes = [8, 32], strides = [1, 1]} : vector<8x128xf32> to vector<8x32xf32>
    %185 = math.tanh %184 : vector<8x32xf32>
    %186 = arith.mulf %182, %169 : vector<8x32xf32>
    %187 = arith.mulf %181, %185 : vector<8x32xf32>
    %188 = arith.addf %186, %187 : vector<8x32xf32>
    %189 = math.tanh %188 : vector<8x32xf32>
    %190 = arith.mulf %183, %189 : vector<8x32xf32>
    %191 = arith.index_cast %c6_i32 : i32 to index
    %c0_47 = arith.constant 0 : index
    %c0_48 = arith.constant 0 : index
    %192 = vector.load %arg2[%191, %c0_47, %c0_48] : memref<8x8x32xf32, #tpu.memory_space<vmem>>, vector<1x8x32xf32>
    %193 = vector.shape_cast %192 : vector<1x8x32xf32> to vector<8x32xf32>
    %cst_49 = arith.constant 0.000000e+00 : f32
    %194 = vector.broadcast %cst_49 : f32 to vector<8x32xf32>
    %195 = arith.cmpf ogt, %193, %194 : vector<8x32xf32>
    %196 = arith.select %195, %190, %168 : vector<8x32xi1>, vector<8x32xf32>
    %197 = arith.select %195, %188, %169 : vector<8x32xi1>, vector<8x32xf32>
    %c7_i32 = arith.constant 7 : i32
    %198 = arith.index_cast %c7_i32 : i32 to index
    %c0_50 = arith.constant 0 : index
    %c0_51 = arith.constant 0 : index
    %199 = vector.load %arg1[%198, %c0_50, %c0_51] : memref<8x8x128xf32, #tpu.memory_space<vmem>>, vector<1x8x128xf32>
    %200 = vector.shape_cast %199 : vector<1x8x128xf32> to vector<8x128xf32>
    %cst_52 = arith.constant dense<0.000000e+00> : vector<8x128xf32>
    %201 = tpu.matmul %196, %0, %cst_52 {dimension_numbers = #tpu.dot_dimension_numbers<[1], [0], [0], [1], [0, 0, 1, 1], [], []>} : vector<8x32xf32>, vector<32x128xf32>, vector<8x128xf32> -> vector<8x128xf32>
    %202 = arith.addf %200, %201 : vector<8x128xf32>
    %203 = vector.extract_strided_slice %202 {offsets = [0, 0], sizes = [8, 96], strides = [1, 1]} : vector<8x128xf32> to vector<8x96xf32>
    %204 = arith.negf %203 : vector<8x96xf32>
    %205 = math.exp %204 : vector<8x96xf32>
    %cst_53 = arith.constant 1.000000e+00 : f32
    %206 = vector.broadcast %cst_53 : f32 to vector<8x96xf32>
    %207 = arith.addf %206, %205 : vector<8x96xf32>
    %208 = arith.divf %206, %207 : vector<8x96xf32>
    %209 = vector.extract_strided_slice %208 {offsets = [0, 0], sizes = [8, 32], strides = [1, 1]} : vector<8x96xf32> to vector<8x32xf32>
    %210 = vector.extract_strided_slice %208 {offsets = [0, 32], sizes = [8, 32], strides = [1, 1]} : vector<8x96xf32> to vector<8x32xf32>
    %211 = vector.extract_strided_slice %208 {offsets = [0, 64], sizes = [8, 32], strides = [1, 1]} : vector<8x96xf32> to vector<8x32xf32>
    %212 = vector.extract_strided_slice %202 {offsets = [0, 96], sizes = [8, 32], strides = [1, 1]} : vector<8x128xf32> to vector<8x32xf32>
    %213 = math.tanh %212 : vector<8x32xf32>
    %214 = arith.mulf %210, %197 : vector<8x32xf32>
    %215 = arith.mulf %209, %213 : vector<8x32xf32>
    %216 = arith.addf %214, %215 : vector<8x32xf32>
    %217 = math.tanh %216 : vector<8x32xf32>
    %218 = arith.mulf %211, %217 : vector<8x32xf32>
    %219 = arith.index_cast %c7_i32 : i32 to index
    %c0_54 = arith.constant 0 : index
    %c0_55 = arith.constant 0 : index
    %220 = vector.load %arg2[%219, %c0_54, %c0_55] : memref<8x8x32xf32, #tpu.memory_space<vmem>>, vector<1x8x32xf32>
    %221 = vector.shape_cast %220 : vector<1x8x32xf32> to vector<8x32xf32>
    %cst_56 = arith.constant 0.000000e+00 : f32
    %222 = vector.broadcast %cst_56 : f32 to vector<8x32xf32>
    %223 = arith.cmpf ogt, %221, %222 : vector<8x32xf32>
    %224 = arith.select %223, %218, %196 : vector<8x32xi1>, vector<8x32xf32>
    %225 = arith.select %223, %216, %197 : vector<8x32xi1>, vector<8x32xf32>
    %c8_i32 = arith.constant 8 : i32
    %c0_57 = arith.constant 0 : index
    %c0_58 = arith.constant 0 : index
    %226 = vector.load %arg4[%c0_57, %c0_58] : memref<8x32xf32, #tpu.memory_space<vmem>>, vector<8x32xf32>
    tpu.vector_store %arg4[%c0_57, %c0_58], %224 {strides = array<i32>} : memref<8x32xf32, #tpu.memory_space<vmem>>, vector<8x32xf32>,
    return
  }
  func.func @transform_0(%arg0: i32) -> (i32, i32, i32) {
    %c0_i32 = arith.constant 0 : i32
    %c0_i32_0 = arith.constant 0 : i32
    %c0_i32_1 = arith.constant 0 : i32
    return %c0_i32, %arg0, %c0_i32_0 : i32, i32, i32
  }
  func.func @transform_1(%arg0: i32) -> (i32, i32, i32) {
    %c0_i32 = arith.constant 0 : i32
    %c0_i32_0 = arith.constant 0 : i32
    %c0_i32_1 = arith.constant 0 : i32
    return %c0_i32, %arg0, %c0_i32_0 : i32, i32, i32
  }
  func.func @transform_2(%arg0: i32) -> (i32, i32) {
    %c0_i32 = arith.constant 0 : i32
    %c0_i32_0 = arith.constant 0 : i32
    %c0_i32_1 = arith.constant 0 : i32
    return %c0_i32, %c0_i32_0 : i32, i32
  }
  func.func @transform_3(%arg0: i32) -> (i32, i32) {
    %c0_i32 = arith.constant 0 : i32
    %c0_i32_0 = arith.constant 0 : i32
    return %arg0, %c0_i32 : i32, i32
  }
}

</mosaic_0001>

<llo_original>
// kernel: tpu_custom_call.1
$region0: #{tpu_custom_call.1}
  #allocation0 [shape = 'u32[]', space=smem, size = 0x4, offset = 0x4, fixed_abs, tag = 'smem constant byte address 0x4 - core index']
  #allocation1 [shape = 'u32[144,128]{1,0:T(1,128)}', space=vmem, size = 0x12000, scoped, tag = 'internal scratch']
  %s0 = inlined_call_operand.hbm [shape: f32[8,8,128], index: 0, kind: input, shape index: {}]
  %s1 = inlined_call_operand.hbm [shape: f32[8,8,32], index: 1, kind: input, shape index: {}]
  %s2 = inlined_call_operand.hbm [shape: f32[32,128], index: 2, kind: input, shape index: {}]
  %s3 = inlined_call_operand.hbm [shape: f32[8,32], index: 3, kind: output, shape index: {}]
  %s4 = sld [smem:[#allocation0]]
  $region34: #{tpu_custom_call.1} parent=0
    _
  %s6 = ssub.s32 1, %s4
  %s7 = scalar_select 0, %s6, %s4
  $region1: #{tpu_custom_call.1} parent=0
    #allocation2 [shape = 'u8[32768]{0}', space=vmem, size = 0x8000, scoped, tag = 'input window, operand 0, single buffered']
    #allocation3 [shape = 's32[1]{0}', space=sflag, size = 0x4, scoped, tag = 'scoped memory for tpu_custom_call.1']
    #allocation4 [shape = 's32[1]{0}', space=sflag, size = 0x4, scoped, tag = 'scoped memory for tpu_custom_call.1']
    #allocation5 [shape = 'u8[32768]{0}', space=vmem, size = 0x8000, scoped, tag = 'input window, operand 1, single buffered']
    #allocation6 [shape = 's32[1]{0}', space=sflag, size = 0x4, scoped, tag = 'scoped memory for tpu_custom_call.1']
    #allocation7 [shape = 'u8[16384]{0}', space=vmem, size = 0x4000, scoped, tag = 'input window, operand 2, single buffered']
    #allocation8 [shape = 'u8[4096]{0}', space=vmem, size = 0x1000, scoped, tag = 'output window, operand 0, single buffered']
    %8 = vsyncpa [#allocation3], 0
    %9 = vsyncpa [#allocation6], 0
    %10 = vsyncpa [#allocation4], 0
    // Predicated region
    $region2: #{tpu_custom_call.1} parent=1 // pred_check
      _
    $region3: #{tpu_custom_call.1} parent=1 // pred_check_branch
      %12 = sbr.rel (0) target = $region5
    $region4: #{tpu_custom_call.1} parent=1 // pred_region
      %s14 = ssub.s32 1024, 1024
      %15 = vsyncadd [#allocation3], %s14
      %s16 = sshll.u32 [#allocation2], 4
      %s17 = int_to_ptr.vmem [resolvable:$true] %s16
      %22 = dma.hbm_to_vmem [thread:$0]  %s0, 1024, %s17, [#allocation3], 128, 128, 8
    $region5: #{tpu_custom_call.1} parent=1 // pred_fallthru
      _
    // Predicated region
    $region6: #{tpu_custom_call.1} parent=1 // pred_check
      _
    $region7: #{tpu_custom_call.1} parent=1 // pred_check_branch
      %24 = sbr.rel (0) target = $region9
    $region8: #{tpu_custom_call.1} parent=1 // pred_region
      %s26 = ssub.s32 1024, 1024
      %27 = vsyncadd [#allocation6], %s26
      %s28 = sshll.u32 [#allocation5], 4
      %s29 = int_to_ptr.vmem [resolvable:$true] %s28
      %34 = dma.hbm_to_vmem [thread:$0]  %s1, 1024, %s29, [#allocation6], 128, 128, 8
    $region9: #{tpu_custom_call.1} parent=1 // pred_fallthru
      _
    // Predicated region
    $region10: #{tpu_custom_call.1} parent=1 // pred_check
      _
    $region11: #{tpu_custom_call.1} parent=1 // pred_check_branch
      %36 = sbr.rel (0) target = $region13
    $region12: #{tpu_custom_call.1} parent=1 // pred_region
      %s38 = ssub.s32 512, 512
      %39 = vsyncadd [#allocation6], %s38
      %s40 = sshll.u32 [#allocation7], 4
      %s41 = int_to_ptr.vmem [resolvable:$true] %s40
      %46 = dma.hbm_to_vmem [thread:$0]  %s2, 512, %s41, [#allocation6], 128, 128, 8
    $region13: #{tpu_custom_call.1} parent=1 // pred_fallthru
      _
    // Predicated region
    $region14: #{tpu_custom_call.1} parent=1 // pred_check
      _
    $region15: #{tpu_custom_call.1} parent=1 // pred_check_branch
      %48 = sbr.rel (0) target = $region17
    $region16: #{tpu_custom_call.1} parent=1 // pred_region
      %49 = dma.done [#allocation3], 1024
    $region17: #{tpu_custom_call.1} parent=1 // pred_fallthru
      _
    // Predicated region
    $region18: #{tpu_custom_call.1} parent=1 // pred_check
      _
    $region19: #{tpu_custom_call.1} parent=1 // pred_check_branch
      %51 = sbr.rel (0) target = $region21
    $region20: #{tpu_custom_call.1} parent=1 // pred_region
      %52 = dma.done [#allocation6], 1024
    $region21: #{tpu_custom_call.1} parent=1 // pred_fallthru
      _
    // Predicated region
    $region22: #{tpu_custom_call.1} parent=1 // pred_check
      _
    $region23: #{tpu_custom_call.1} parent=1 // pred_check_branch
      %54 = sbr.rel (0) target = $region25
    $region24: #{tpu_custom_call.1} parent=1 // pred_region
      %55 = dma.done [#allocation6], 512
    $region25: #{tpu_custom_call.1} parent=1 // pred_fallthru
      _
    %v56 = vld [vmem:[#allocation7] sm:$0xff]
    %v57 = vld [vmem:[#allocation7 + $0x8] sm:$0xff]
    %v58 = vld [vmem:[#allocation7 + $0x10] sm:$0xff]
    %v59 = vld [vmem:[#allocation7 + $0x18] sm:$0xff]
    %v60 = vld [vmem:[#allocation2] sm:$0xff]
    %vm61 = vcmask 261120
    %v63 = vsel %vm61, 0.0, 0
    %65 = vmatprep.subr.mxu0 0.0
    %66 = vmatpush1.msra.mxu0 %v56
    %67 = vmatprep.subr.mxu0 0.0
    %68 = vmatpush1.msra.mxu0 %v57
    %69 = vmatprep.subr.mxu0 0.0
    %70 = vmatpush1.msra.mxu0 %v58
    %71 = vmatprep.subr.mxu0 0.0
    %72 = vmatpush1.msra.mxu0 %v59
    %73 = vmatprep.subr.mxu0 0.0
    %74 = vmatpush1.msra.mxu0 0.0
    %75 = vmatprep.subr.mxu0 0.0
    %76 = vmatpush1.msra.mxu0 0.0
    %77 = vmatprep.subr.mxu0 0.0
    %78 = vmatpush1.msra.mxu0 0.0
    %79 = vmatprep.subr.mxu0 0.0
    %80 = vmatpush1.msra.mxu0 0.0
    %81 = vmatprep.subr.mxu0 0.0
    %82 = vmatpush1.msra.mxu0 0.0
    %83 = vmatprep.subr.mxu0 0.0
    %84 = vmatpush1.msra.mxu0 0.0
    %85 = vmatprep.subr.mxu0 0.0
    %86 = vmatpush1.msra.mxu0 0.0
    %87 = vmatprep.subr.mxu0 0.0
    %88 = vmatpush1.msra.mxu0 0.0
    %89 = vmatprep.subr.mxu0 0.0
    %90 = vmatpush1.msra.mxu0 0.0
    %91 = vmatprep.subr.mxu0 0.0
    %92 = vmatpush1.msra.mxu0 0.0
    %93 = vmatprep.subr.mxu0 0.0
    %94 = vmatpush1.msra.mxu0 0.0
    %95 = vmatprep.subr.mxu0 0.0
    %96 = vmatpush1.msra.mxu0 0.0
    %97 = vmatprep.subr.mxu0 0.0
    %98 = vmatpush1.msra.mxu0 0.0
    %99 = vmatprep.subr.mxu0 0.0
    %100 = vmatpush1.msra.mxu0 0.0
    %101 = vmatprep.subr.mxu0 0.0
    %102 = vmatpush1.msra.mxu0 0.0
    %103 = vmatprep.subr.mxu0 0.0
    %104 = vmatpush1.msra.mxu0 0.0
    %105 = vmatprep.subr.mxu0 0.0
    %106 = vmatpush1.msra.mxu0 0.0
    %107 = vmatprep.subr.mxu0 0.0
    %108 = vmatpush1.msra.mxu0 0.0
    %109 = vmatprep.subr.mxu0 0.0
    %110 = vmatpush1.msra.mxu0 0.0
    %111 = vmatprep.subr.mxu0 0.0
    %112 = vmatpush1.msra.mxu0 0.0
    %113 = vmatprep.subr.mxu0 0.0
    %114 = vmatpush1.msra.mxu0 0.0
    %115 = vmatprep.subr.mxu0 0.0
    %116 = vmatpush1.msra.mxu0 0.0
    %117 = vmatprep.subr.mxu0 0.0
    %118 = vmatpush1.msra.mxu0 0.0
    %119 = vmatprep.subr.mxu0 0.0
    %120 = vmatpush1.msra.mxu0 0.0
    %121 = vmatprep.subr.mxu0 0.0
    %122 = vmatpush1.msra.mxu0 0.0
    %123 = vmatprep.subr.mxu0 0.0
    %124 = vmatpush1.msra.mxu0 0.0
    %125 = vmatprep.subr.mxu0 0.0
    %126 = vmatpush1.msra.mxu0 0.0
    %127 = vmatprep.subr.mxu0 0.0
    %128 = vmatpush1.msra.mxu0 0.0
    %129 = vmatprep.mubr.f32.mxu0 0.0
    %130 = vmatmul.mubr.f32.gmra.mrb[0].mxu0 %v63
    %v131 = vpop.f32.mrb[0].mxu0
    %v132 = vadd.f32 0.0, %v131
    %v133 = vpop.f32.mrb[0].mxu0
    %134 = vdwg.mxu0
    %v135 = vadd.f32 %v60, %v132
    %v136 = vxor.u32 %v135, 2147483648
    %v137 = vmul.f32 %v136, 1.442695
    %v138 = vpow.pop %v137
    %v139 = vadd.f32 %v138, 1.0
    %v140 = vrcp.pop %v139
    %v141 = vmul.f32 1.0, %v140
    %v142 = vtanh.pop %v135
    %v143 = vmul.f32 %v141, 0.0
    %145 = vrot.lane.b32.xlu0 %v142, 32
    %v146 = vpop.permute.xlu0 %145
    %v148 = vmul.f32 %v141, %v146
    %150 = vrot.lane.b32.xlu0 %v148, 32
    %v151 = vpop.permute.xlu0 %150
    %v153 = vadd.f32 %v143, %v151
    %v154 = vtanh.pop %v153
    %156 = vrot.lane.b32.xlu0 %v154, 32
    %v157 = vpop.permute.xlu0 %156
    %v159 = vmul.f32 %v141, %v157
    %v160 = vld [vmem:[#allocation5] sm:$0xff]
    %vm161 = vcmp.gt.f32.partialorder %v160, 0.0
    %163 = vrot.lane.b32.xlu0 %v159, 64
    %v164 = vpop.permute.xlu0 %163
    %v166 = vsel %vm161, %v164, 0.0
    %168 = vrot.lane.b32.xlu0 %v153, 96
    %v169 = vpop.permute.xlu0 %168
    %v171 = vsel %vm161, %v169, 0.0
    %s172 = scalar_lea.vmem [#allocation2], 8
    %v173 = vld [vmem:[%s172] sm:$0xff]
    %v175 = vsel %vm61, %v166, 0
    %177 = vmatprep.subr.mxu0 0.0
    %178 = vmatpush1.msra.mxu0 %v56
    %179 = vmatprep.subr.mxu0 0.0
    %180 = vmatpush1.msra.mxu0 %v57
    %181 = vmatprep.subr.mxu0 0.0
    %182 = vmatpush1.msra.mxu0 %v58
    %183 = vmatprep.subr.mxu0 0.0
    %184 = vmatpush1.msra.mxu0 %v59
    %185 = vmatprep.subr.mxu0 0.0
    %186 = vmatpush1.msra.mxu0 0.0
    %187 = vmatprep.subr.mxu0 0.0
    %188 = vmatpush1.msra.mxu0 0.0
    %189 = vmatprep.subr.mxu0 0.0
    %190 = vmatpush1.msra.mxu0 0.0
    %191 = vmatprep.subr.mxu0 0.0
    %192 = vmatpush1.msra.mxu0 0.0
    %193 = vmatprep.subr.mxu0 0.0
    %194 = vmatpush1.msra.mxu0 0.0
    %195 = vmatprep.subr.mxu0 0.0
    %196 = vmatpush1.msra.mxu0 0.0
    %197 = vmatprep.subr.mxu0 0.0
    %198 = vmatpush1.msra.mxu0 0.0
    %199 = vmatprep.subr.mxu0 0.0
    %200 = vmatpush1.msra.mxu0 0.0
    %201 = vmatprep.subr.mxu0 0.0
    %202 = vmatpush1.msra.mxu0 0.0
    %203 = vmatprep.subr.mxu0 0.0
    %204 = vmatpush1.msra.mxu0 0.0
    %205 = vmatprep.subr.mxu0 0.0
    %206 = vmatpush1.msra.mxu0 0.0
    %207 = vmatprep.subr.mxu0 0.0
    %208 = vmatpush1.msra.mxu0 0.0
    %209 = vmatprep.subr.mxu0 0.0
    %210 = vmatpush1.msra.mxu0 0.0
    %211 = vmatprep.subr.mxu0 0.0
    %212 = vmatpush1.msra.mxu0 0.0
    %213 = vmatprep.subr.mxu0 0.0
    %214 = vmatpush1.msra.mxu0 0.0
    %215 = vmatprep.subr.mxu0 0.0
    %216 = vmatpush1.msra.mxu0 0.0
    %217 = vmatprep.subr.mxu0 0.0
    %218 = vmatpush1.msra.mxu0 0.0
    %219 = vmatprep.subr.mxu0 0.0
    %220 = vmatpush1.msra.mxu0 0.0
    %221 = vmatprep.subr.mxu0 0.0
    %222 = vmatpush1.msra.mxu0 0.0
    %223 = vmatprep.subr.mxu0 0.0
    %224 = vmatpush1.msra.mxu0 0.0
    %225 = vmatprep.subr.mxu0 0.0
    %226 = vmatpush1.msra.mxu0 0.0
    %227 = vmatprep.subr.mxu0 0.0
    %228 = vmatpush1.msra.mxu0 0.0
    %229 = vmatprep.subr.mxu0 0.0
    %230 = vmatpush1.msra.mxu0 0.0
    %231 = vmatprep.subr.mxu0 0.0
    %232 = vmatpush1.msra.mxu0 0.0
    %233 = vmatprep.subr.mxu0 0.0
    %234 = vmatpush1.msra.mxu0 0.0
    %235 = vmatprep.subr.mxu0 0.0
    %236 = vmatpush1.msra.mxu0 0.0
    %237 = vmatprep.subr.mxu0 0.0
    %238 = vmatpush1.msra.mxu0 0.0
    %239 = vmatprep.subr.mxu0 0.0
    %240 = vmatpush1.msra.mxu0 0.0
    %241 = vmatprep.mubr.f32.mxu0 0.0
    %242 = vmatmul.mubr.f32.gmra.mrb[0].mxu0 %v175
    %v243 = vpop.f32.mrb[0].mxu0
    %v244 = vadd.f32 0.0, %v243
    %v245 = vpop.f32.mrb[0].mxu0
    %246 = vdwg.mxu0
    %v247 = vadd.f32 %v173, %v244
    %v248 = vxor.u32 %v247, 2147483648
    %v249 = vmul.f32 %v248, 1.442695
    %v250 = vpow.pop %v249
    %v251 = vadd.f32 %v250, 1.0
    %v252 = vrcp.pop %v251
    %v253 = vmul.f32 1.0, %v252
    %v254 = vtanh.pop %v247
    %256 = vrot.lane.b32.xlu0 %v171, 32
    %v257 = vpop.permute.xlu0 %256
    %v259 = vmul.f32 %v253, %v257
    %261 = vrot.lane.b32.xlu0 %v254, 32
    %v262 = vpop.permute.xlu0 %261
    %v264 = vmul.f32 %v253, %v262
    %266 = vrot.lane.b32.xlu0 %v264, 32
    %v267 = vpop.permute.xlu0 %266
    %v269 = vadd.f32 %v259, %v267
    %v270 = vtanh.pop %v269
    %272 = vrot.lane.b32.xlu0 %v270, 32
    %v273 = vpop.permute.xlu0 %272
    %v275 = vmul.f32 %v253, %v273
    %s276 = scalar_lea.vmem [#allocation5], 8
    %v277 = vld [vmem:[%s276] sm:$0xff]
    %vm278 = vcmp.gt.f32.partialorder %v277, 0.0
    %280 = vrot.lane.b32.xlu0 %v275, 64
    %v281 = vpop.permute.xlu0 %280
    %v283 = vsel %vm278, %v281, %v166
    %285 = vrot.lane.b32.xlu0 %v269, 96
    %v286 = vpop.permute.xlu0 %285
    %v288 = vsel %vm278, %v286, %v171
    %s289 = scalar_lea.vmem [#allocation2], 16
    %v290 = vld [vmem:[%s289] sm:$0xff]
    %v292 = vsel %vm61, %v283, 0
    %294 = vmatprep.subr.mxu0 0.0
    %295 = vmatpush1.msra.mxu0 %v56
    %296 = vmatprep.subr.mxu0 0.0
    %297 = vmatpush1.msra.mxu0 %v57
    %298 = vmatprep.subr.mxu0 0.0
    %299 = vmatpush1.msra.mxu0 %v58
    %300 = vmatprep.subr.mxu0 0.0
    %301 = vmatpush1.msra.mxu0 %v59
    %302 = vmatprep.subr.mxu0 0.0
    %303 = vmatpush1.msra.mxu0 0.0
    %304 = vmatprep.subr.mxu0 0.0
    %305 = vmatpush1.msra.mxu0 0.0
    %306 = vmatprep.subr.mxu0 0.0
    %307 = vmatpush1.msra.mxu0 0.0
    %308 = vmatprep.subr.mxu0 0.0
    %309 = vmatpush1.msra.mxu0 0.0
    %310 = vmatprep.subr.mxu0 0.0
    %311 = vmatpush1.msra.mxu0 0.0
    %312 = vmatprep.subr.mxu0 0.0
    %313 = vmatpush1.msra.mxu0 0.0
    %314 = vmatprep.subr.mxu0 0.0
    %315 = vmatpush1.msra.mxu0 0.0
    %316 = vmatprep.subr.mxu0 0.0
    %317 = vmatpush1.msra.mxu0 0.0
    %318 = vmatprep.subr.mxu0 0.0
    %319 = vmatpush1.msra.mxu0 0.0
    %320 = vmatprep.subr.mxu0 0.0
    %321 = vmatpush1.msra.mxu0 0.0
    %322 = vmatprep.subr.mxu0 0.0
    %323 = vmatpush1.msra.mxu0 0.0
    %324 = vmatprep.subr.mxu0 0.0
    %325 = vmatpush1.msra.mxu0 0.0
    %326 = vmatprep.subr.mxu0 0.0
    %327 = vmatpush1.msra.mxu0 0.0
    %328 = vmatprep.subr.mxu0 0.0
    %329 = vmatpush1.msra.mxu0 0.0
    %330 = vmatprep.subr.mxu0 0.0
    %331 = vmatpush1.msra.mxu0 0.0
    %332 = vmatprep.subr.mxu0 0.0
    %333 = vmatpush1.msra.mxu0 0.0
    %334 = vmatprep.subr.mxu0 0.0
    %335 = vmatpush1.msra.mxu0 0.0
    %336 = vmatprep.subr.mxu0 0.0
    %337 = vmatpush1.msra.mxu0 0.0
    %338 = vmatprep.subr.mxu0 0.0
    %339 = vmatpush1.msra.mxu0 0.0
    %340 = vmatprep.subr.mxu0 0.0
    %341 = vmatpush1.msra.mxu0 0.0
    %342 = vmatprep.subr.mxu0 0.0
    %343 = vmatpush1.msra.mxu0 0.0
    %344 = vmatprep.subr.mxu0 0.0
    %345 = vmatpush1.msra.mxu0 0.0
    %346 = vmatprep.subr.mxu0 0.0
    %347 = vmatpush1.msra.mxu0 0.0
    %348 = vmatprep.subr.mxu0 0.0
    %349 = vmatpush1.msra.mxu0 0.0
    %350 = vmatprep.subr.mxu0 0.0
    %351 = vmatpush1.msra.mxu0 0.0
    %352 = vmatprep.subr.mxu0 0.0
    %353 = vmatpush1.msra.mxu0 0.0
    %354 = vmatprep.subr.mxu0 0.0
    %355 = vmatpush1.msra.mxu0 0.0
    %356 = vmatprep.subr.mxu0 0.0
    %357 = vmatpush1.msra.mxu0 0.0
    %358 = vmatprep.mubr.f32.mxu0 0.0
    %359 = vmatmul.mubr.f32.gmra.mrb[0].mxu0 %v292
    %v360 = vpop.f32.mrb[0].mxu0
    %v361 = vadd.f32 0.0, %v360
    %v362 = vpop.f32.mrb[0].mxu0
    %363 = vdwg.mxu0
    %v364 = vadd.f32 %v290, %v361
    %v365 = vxor.u32 %v364, 2147483648
    %v366 = vmul.f32 %v365, 1.442695
    %v367 = vpow.pop %v366
    %v368 = vadd.f32 %v367, 1.0
    %v369 = vrcp.pop %v368
    %v370 = vmul.f32 1.0, %v369
    %v371 = vtanh.pop %v364
    %373 = vrot.lane.b32.xlu0 %v288, 32
    %v374 = vpop.permute.xlu0 %373
    %v376 = vmul.f32 %v370, %v374
    %378 = vrot.lane.b32.xlu0 %v371, 32
    %v379 = vpop.permute.xlu0 %378
    %v381 = vmul.f32 %v370, %v379
    %383 = vrot.lane.b32.xlu0 %v381, 32
    %v384 = vpop.permute.xlu0 %383
    %v386 = vadd.f32 %v376, %v384
    %v387 = vtanh.pop %v386
    %389 = vrot.lane.b32.xlu0 %v387, 32
    %v390 = vpop.permute.xlu0 %389
    %v392 = vmul.f32 %v370, %v390
    %s393 = scalar_lea.vmem [#allocation5], 16
    %v394 = vld [vmem:[%s393] sm:$0xff]
    %vm395 = vcmp.gt.f32.partialorder %v394, 0.0
    %397 = vrot.lane.b32.xlu0 %v392, 64
    %v398 = vpop.permute.xlu0 %397
    %v400 = vsel %vm395, %v398, %v283
    %402 = vrot.lane.b32.xlu0 %v386, 96
    %v403 = vpop.permute.xlu0 %402
    %v405 = vsel %vm395, %v403, %v288
    %s406 = scalar_lea.vmem [#allocation2], 24
    %v407 = vld [vmem:[%s406] sm:$0xff]
    %v409 = vsel %vm61, %v400, 0
    %411 = vmatprep.subr.mxu0 0.0
    %412 = vmatpush1.msra.mxu0 %v56
    %413 = vmatprep.subr.mxu0 0.0
    %414 = vmatpush1.msra.mxu0 %v57
    %415 = vmatprep.subr.mxu0 0.0
    %416 = vmatpush1.msra.mxu0 %v58
    %417 = vmatprep.subr.mxu0 0.0
    %418 = vmatpush1.msra.mxu0 %v59
    %419 = vmatprep.subr.mxu0 0.0
    %420 = vmatpush1.msra.mxu0 0.0
    %421 = vmatprep.subr.mxu0 0.0
    %422 = vmatpush1.msra.mxu0 0.0
    %423 = vmatprep.subr.mxu0 0.0
    %424 = vmatpush1.msra.mxu0 0.0
    %425 = vmatprep.subr.mxu0 0.0
    %426 = vmatpush1.msra.mxu0 0.0
    %427 = vmatprep.subr.mxu0 0.0
    %428 = vmatpush1.msra.mxu0 0.0
    %429 = vmatprep.subr.mxu0 0.0
    %430 = vmatpush1.msra.mxu0 0.0
    %431 = vmatprep.subr.mxu0 0.0
    %432 = vmatpush1.msra.mxu0 0.0
    %433 = vmatprep.subr.mxu0 0.0
    %434 = vmatpush1.msra.mxu0 0.0
    %435 = vmatprep.subr.mxu0 0.0
    %436 = vmatpush1.msra.mxu0 0.0
    %437 = vmatprep.subr.mxu0 0.0
    %438 = vmatpush1.msra.mxu0 0.0
    %439 = vmatprep.subr.mxu0 0.0
    %440 = vmatpush1.msra.mxu0 0.0
    %441 = vmatprep.subr.mxu0 0.0
    %442 = vmatpush1.msra.mxu0 0.0
    %443 = vmatprep.subr.mxu0 0.0
    %444 = vmatpush1.msra.mxu0 0.0
    %445 = vmatprep.subr.mxu0 0.0
    %446 = vmatpush1.msra.mxu0 0.0
    %447 = vmatprep.subr.mxu0 0.0
    %448 = vmatpush1.msra.mxu0 0.0
    %449 = vmatprep.subr.mxu0 0.0
    %450 = vmatpush1.msra.mxu0 0.0
    %451 = vmatprep.subr.mxu0 0.0
    %452 = vmatpush1.msra.mxu0 0.0
    %453 = vmatprep.subr.mxu0 0.0
    %454 = vmatpush1.msra.mxu0 0.0
    %455 = vmatprep.subr.mxu0 0.0
    %456 = vmatpush1.msra.mxu0 0.0
    %457 = vmatprep.subr.mxu0 0.0
    %458 = vmatpush1.msra.mxu0 0.0
    %459 = vmatprep.subr.mxu0 0.0
    %460 = vmatpush1.msra.mxu0 0.0
    %461 = vmatprep.subr.mxu0 0.0
    %462 = vmatpush1.msra.mxu0 0.0
    %463 = vmatprep.subr.mxu0 0.0
    %464 = vmatpush1.msra.mxu0 0.0
    %465 = vmatprep.subr.mxu0 0.0
    %466 = vmatpush1.msra.mxu0 0.0
    %467 = vmatprep.subr.mxu0 0.0
    %468 = vmatpush1.msra.mxu0 0.0
    %469 = vmatprep.subr.mxu0 0.0
    %470 = vmatpush1.msra.mxu0 0.0
    %471 = vmatprep.subr.mxu0 0.0
    %472 = vmatpush1.msra.mxu0 0.0
    %473 = vmatprep.subr.mxu0 0.0
    %474 = vmatpush1.msra.mxu0 0.0
    %475 = vmatprep.mubr.f32.mxu0 0.0
    %476 = vmatmul.mubr.f32.gmra.mrb[0].mxu0 %v409
    %v477 = vpop.f32.mrb[0].mxu0
    %v478 = vadd.f32 0.0, %v477
    %v479 = vpop.f32.mrb[0].mxu0
    %480 = vdwg.mxu0
    %v481 = vadd.f32 %v407, %v478
    %v482 = vxor.u32 %v481, 2147483648
    %v483 = vmul.f32 %v482, 1.442695
    %v484 = vpow.pop %v483
    %v485 = vadd.f32 %v484, 1.0
    %v486 = vrcp.pop %v485
    %v487 = vmul.f32 1.0, %v486
    %v488 = vtanh.pop %v481
    %490 = vrot.lane.b32.xlu0 %v405, 32
    %v491 = vpop.permute.xlu0 %490
    %v493 = vmul.f32 %v487, %v491
    %495 = vrot.lane.b32.xlu0 %v488, 32
    %v496 = vpop.permute.xlu0 %495
    %v498 = vmul.f32 %v487, %v496
    %500 = vrot.lane.b32.xlu0 %v498, 32
    %v501 = vpop.permute.xlu0 %500
    %v503 = vadd.f32 %v493, %v501
    %v504 = vtanh.pop %v503
    %506 = vrot.lane.b32.xlu0 %v504, 32
    %v507 = vpop.permute.xlu0 %506
    %v509 = vmul.f32 %v487, %v507
    %s510 = scalar_lea.vmem [#allocation5], 24
    %v511 = vld [vmem:[%s510] sm:$0xff]
    %vm512 = vcmp.gt.f32.partialorder %v511, 0.0
    %514 = vrot.lane.b32.xlu0 %v509, 64
    %v515 = vpop.permute.xlu0 %514
    %v517 = vsel %vm512, %v515, %v400
    %519 = vrot.lane.b32.xlu0 %v503, 96
    %v520 = vpop.permute.xlu0 %519
    %v522 = vsel %vm512, %v520, %v405
    %s523 = scalar_lea.vmem [#allocation2], 32
    %v524 = vld [vmem:[%s523] sm:$0xff]
    %v526 = vsel %vm61, %v517, 0
    %528 = vmatprep.subr.mxu0 0.0
    %529 = vmatpush1.msra.mxu0 %v56
    %530 = vmatprep.subr.mxu0 0.0
    %531 = vmatpush1.msra.mxu0 %v57
    %532 = vmatprep.subr.mxu0 0.0
    %533 = vmatpush1.msra.mxu0 %v58
    %534 = vmatprep.subr.mxu0 0.0
    %535 = vmatpush1.msra.mxu0 %v59
    %536 = vmatprep.subr.mxu0 0.0
    %537 = vmatpush1.msra.mxu0 0.0
    %538 = vmatprep.subr.mxu0 0.0
    %539 = vmatpush1.msra.mxu0 0.0
    %540 = vmatprep.subr.mxu0 0.0
    %541 = vmatpush1.msra.mxu0 0.0
    %542 = vmatprep.subr.mxu0 0.0
    %543 = vmatpush1.msra.mxu0 0.0
    %544 = vmatprep.subr.mxu0 0.0
    %545 = vmatpush1.msra.mxu0 0.0
    %546 = vmatprep.subr.mxu0 0.0
    %547 = vmatpush1.msra.mxu0 0.0
    %548 = vmatprep.subr.mxu0 0.0
    %549 = vmatpush1.msra.mxu0 0.0
    %550 = vmatprep.subr.mxu0 0.0
    %551 = vmatpush1.msra.mxu0 0.0
    %552 = vmatprep.subr.mxu0 0.0
    %553 = vmatpush1.msra.mxu0 0.0
    %554 = vmatprep.subr.mxu0 0.0
    %555 = vmatpush1.msra.mxu0 0.0
    %556 = vmatprep.subr.mxu0 0.0
    %557 = vmatpush1.msra.mxu0 0.0
    %558 = vmatprep.subr.mxu0 0.0
    %559 = vmatpush1.msra.mxu0 0.0
    %560 = vmatprep.subr.mxu0 0.0
    %561 = vmatpush1.msra.mxu0 0.0
    %562 = vmatprep.subr.mxu0 0.0
    %563 = vmatpush1.msra.mxu0 0.0
    %564 = vmatprep.subr.mxu0 0.0
    %565 = vmatpush1.msra.mxu0 0.0
    %566 = vmatprep.subr.mxu0 0.0
    %567 = vmatpush1.msra.mxu0 0.0
    %568 = vmatprep.subr.mxu0 0.0
    %569 = vmatpush1.msra.mxu0 0.0
    %570 = vmatprep.subr.mxu0 0.0
    %571 = vmatpush1.msra.mxu0 0.0
    %572 = vmatprep.subr.mxu0 0.0
    %573 = vmatpush1.msra.mxu0 0.0
    %574 = vmatprep.subr.mxu0 0.0
    %575 = vmatpush1.msra.mxu0 0.0
    %576 = vmatprep.subr.mxu0 0.0
    %577 = vmatpush1.msra.mxu0 0.0
    %578 = vmatprep.subr.mxu0 0.0
    %579 = vmatpush1.msra.mxu0 0.0
    %580 = vmatprep.subr.mxu0 0.0
    %581 = vmatpush1.msra.mxu0 0.0
    %582 = vmatprep.subr.mxu0 0.0
    %583 = vmatpush1.msra.mxu0 0.0
    %584 = vmatprep.subr.mxu0 0.0
    %585 = vmatpush1.msra.mxu0 0.0
    %586 = vmatprep.subr.mxu0 0.0
    %587 = vmatpush1.msra.mxu0 0.0
    %588 = vmatprep.subr.mxu0 0.0
    %589 = vmatpush1.msra.mxu0 0.0
    %590 = vmatprep.subr.mxu0 0.0
    %591 = vmatpush1.msra.mxu0 0.0
    %592 = vmatprep.mubr.f32.mxu0 0.0
    %593 = vmatmul.mubr.f32.gmra.mrb[0].mxu0 %v526
    %v594 = vpop.f32.mrb[0].mxu0
    %v595 = vadd.f32 0.0, %v594
    %v596 = vpop.f32.mrb[0].mxu0
    %597 = vdwg.mxu0
    %v598 = vadd.f32 %v524, %v595
    %v599 = vxor.u32 %v598, 2147483648
    %v600 = vmul.f32 %v599, 1.442695
    %v601 = vpow.pop %v600
    %v602 = vadd.f32 %v601, 1.0
    %v603 = vrcp.pop %v602
    %v604 = vmul.f32 1.0, %v603
    %v605 = vtanh.pop %v598
    %607 = vrot.lane.b32.xlu0 %v522, 32
    %v608 = vpop.permute.xlu0 %607
    %v610 = vmul.f32 %v604, %v608
    %612 = vrot.lane.b32.xlu0 %v605, 32
    %v613 = vpop.permute.xlu0 %612
    %v615 = vmul.f32 %v604, %v613
    %617 = vrot.lane.b32.xlu0 %v615, 32
    %v618 = vpop.permute.xlu0 %617
    %v620 = vadd.f32 %v610, %v618
    %v621 = vtanh.pop %v620
    %623 = vrot.lane.b32.xlu0 %v621, 32
    %v624 = vpop.permute.xlu0 %623
    %v626 = vmul.f32 %v604, %v624
    %s627 = scalar_lea.vmem [#allocation5], 32
    %v628 = vld [vmem:[%s627] sm:$0xff]
    %vm629 = vcmp.gt.f32.partialorder %v628, 0.0
    %631 = vrot.lane.b32.xlu0 %v626, 64
    %v632 = vpop.permute.xlu0 %631
    %v634 = vsel %vm629, %v632, %v517
    %636 = vrot.lane.b32.xlu0 %v620, 96
    %v637 = vpop.permute.xlu0 %636
    %v639 = vsel %vm629, %v637, %v522
    %s640 = scalar_lea.vmem [#allocation2], 40
    %v641 = vld [vmem:[%s640] sm:$0xff]
    %v643 = vsel %vm61, %v634, 0
    %645 = vmatprep.subr.mxu0 0.0
    %646 = vmatpush1.msra.mxu0 %v56
    %647 = vmatprep.subr.mxu0 0.0
    %648 = vmatpush1.msra.mxu0 %v57
    %649 = vmatprep.subr.mxu0 0.0
    %650 = vmatpush1.msra.mxu0 %v58
    %651 = vmatprep.subr.mxu0 0.0
    %652 = vmatpush1.msra.mxu0 %v59
    %653 = vmatprep.subr.mxu0 0.0
    %654 = vmatpush1.msra.mxu0 0.0
    %655 = vmatprep.subr.mxu0 0.0
    %656 = vmatpush1.msra.mxu0 0.0
    %657 = vmatprep.subr.mxu0 0.0
    %658 = vmatpush1.msra.mxu0 0.0
    %659 = vmatprep.subr.mxu0 0.0
    %660 = vmatpush1.msra.mxu0 0.0
    %661 = vmatprep.subr.mxu0 0.0
    %662 = vmatpush1.msra.mxu0 0.0
    %663 = vmatprep.subr.mxu0 0.0
    %664 = vmatpush1.msra.mxu0 0.0
    %665 = vmatprep.subr.mxu0 0.0
    %666 = vmatpush1.msra.mxu0 0.0
    %667 = vmatprep.subr.mxu0 0.0
    %668 = vmatpush1.msra.mxu0 0.0
    %669 = vmatprep.subr.mxu0 0.0
    %670 = vmatpush1.msra.mxu0 0.0
    %671 = vmatprep.subr.mxu0 0.0
    %672 = vmatpush1.msra.mxu0 0.0
    %673 = vmatprep.subr.mxu0 0.0
    %674 = vmatpush1.msra.mxu0 0.0
    %675 = vmatprep.subr.mxu0 0.0
    %676 = vmatpush1.msra.mxu0 0.0
    %677 = vmatprep.subr.mxu0 0.0
    %678 = vmatpush1.msra.mxu0 0.0
    %679 = vmatprep.subr.mxu0 0.0
    %680 = vmatpush1.msra.mxu0 0.0
    %681 = vmatprep.subr.mxu0 0.0
    %682 = vmatpush1.msra.mxu0 0.0
    %683 = vmatprep.subr.mxu0 0.0
    %684 = vmatpush1.msra.mxu0 0.0
    %685 = vmatprep.subr.mxu0 0.0
    %686 = vmatpush1.msra.mxu0 0.0
    %687 = vmatprep.subr.mxu0 0.0
    %688 = vmatpush1.msra.mxu0 0.0
    %689 = vmatprep.subr.mxu0 0.0
    %690 = vmatpush1.msra.mxu0 0.0
    %691 = vmatprep.subr.mxu0 0.0
    %692 = vmatpush1.msra.mxu0 0.0
    %693 = vmatprep.subr.mxu0 0.0
    %694 = vmatpush1.msra.mxu0 0.0
    %695 = vmatprep.subr.mxu0 0.0
    %696 = vmatpush1.msra.mxu0 0.0
    %697 = vmatprep.subr.mxu0 0.0
    %698 = vmatpush1.msra.mxu0 0.0
    %699 = vmatprep.subr.mxu0 0.0
    %700 = vmatpush1.msra.mxu0 0.0
    %701 = vmatprep.subr.mxu0 0.0
    %702 = vmatpush1.msra.mxu0 0.0
    %703 = vmatprep.subr.mxu0 0.0
    %704 = vmatpush1.msra.mxu0 0.0
    %705 = vmatprep.subr.mxu0 0.0
    %706 = vmatpush1.msra.mxu0 0.0
    %707 = vmatprep.subr.mxu0 0.0
    %708 = vmatpush1.msra.mxu0 0.0
    %709 = vmatprep.mubr.f32.mxu0 0.0
    %710 = vmatmul.mubr.f32.gmra.mrb[0].mxu0 %v643
    %v711 = vpop.f32.mrb[0].mxu0
    %v712 = vadd.f32 0.0, %v711
    %v713 = vpop.f32.mrb[0].mxu0
    %714 = vdwg.mxu0
    %v715 = vadd.f32 %v641, %v712
    %v716 = vxor.u32 %v715, 2147483648
    %v717 = vmul.f32 %v716, 1.442695
    %v718 = vpow.pop %v717
    %v719 = vadd.f32 %v718, 1.0
    %v720 = vrcp.pop %v719
    %v721 = vmul.f32 1.0, %v720
    %v722 = vtanh.pop %v715
    %724 = vrot.lane.b32.xlu0 %v639, 32
    %v725 = vpop.permute.xlu0 %724
    %v727 = vmul.f32 %v721, %v725
    %729 = vrot.lane.b32.xlu0 %v722, 32
    %v730 = vpop.permute.xlu0 %729
    %v732 = vmul.f32 %v721, %v730
    %734 = vrot.lane.b32.xlu0 %v732, 32
    %v735 = vpop.permute.xlu0 %734
    %v737 = vadd.f32 %v727, %v735
    %v738 = vtanh.pop %v737
    %740 = vrot.lane.b32.xlu0 %v738, 32
    %v741 = vpop.permute.xlu0 %740
    %v743 = vmul.f32 %v721, %v741
    %s744 = scalar_lea.vmem [#allocation5], 40
    %v745 = vld [vmem:[%s744] sm:$0xff]
    %vm746 = vcmp.gt.f32.partialorder %v745, 0.0
    %748 = vrot.lane.b32.xlu0 %v743, 64
    %v749 = vpop.permute.xlu0 %748
    %v751 = vsel %vm746, %v749, %v634
    %753 = vrot.lane.b32.xlu0 %v737, 96
    %v754 = vpop.permute.xlu0 %753
    %v756 = vsel %vm746, %v754, %v639
    %s757 = scalar_lea.vmem [#allocation2], 48
    %v758 = vld [vmem:[%s757] sm:$0xff]
    %v760 = vsel %vm61, %v751, 0
    %762 = vmatprep.subr.mxu0 0.0
    %763 = vmatpush1.msra.mxu0 %v56
    %764 = vmatprep.subr.mxu0 0.0
    %765 = vmatpush1.msra.mxu0 %v57
    %766 = vmatprep.subr.mxu0 0.0
    %767 = vmatpush1.msra.mxu0 %v58
    %768 = vmatprep.subr.mxu0 0.0
    %769 = vmatpush1.msra.mxu0 %v59
    %770 = vmatprep.subr.mxu0 0.0
    %771 = vmatpush1.msra.mxu0 0.0
    %772 = vmatprep.subr.mxu0 0.0
    %773 = vmatpush1.msra.mxu0 0.0
    %774 = vmatprep.subr.mxu0 0.0
    %775 = vmatpush1.msra.mxu0 0.0
    %776 = vmatprep.subr.mxu0 0.0
    %777 = vmatpush1.msra.mxu0 0.0
    %778 = vmatprep.subr.mxu0 0.0
    %779 = vmatpush1.msra.mxu0 0.0
    %780 = vmatprep.subr.mxu0 0.0
    %781 = vmatpush1.msra.mxu0 0.0
    %782 = vmatprep.subr.mxu0 0.0
    %783 = vmatpush1.msra.mxu0 0.0
    %784 = vmatprep.subr.mxu0 0.0
    %785 = vmatpush1.msra.mxu0 0.0
    %786 = vmatprep.subr.mxu0 0.0
    %787 = vmatpush1.msra.mxu0 0.0
    %788 = vmatprep.subr.mxu0 0.0
    %789 = vmatpush1.msra.mxu0 0.0
    %790 = vmatprep.subr.mxu0 0.0
    %791 = vmatpush1.msra.mxu0 0.0
    %792 = vmatprep.subr.mxu0 0.0
    %793 = vmatpush1.msra.mxu0 0.0
    %794 = vmatprep.subr.mxu0 0.0
    %795 = vmatpush1.msra.mxu0 0.0
    %796 = vmatprep.subr.mxu0 0.0
    %797 = vmatpush1.msra.mxu0 0.0
    %798 = vmatprep.subr.mxu0 0.0
    %799 = vmatpush1.msra.mxu0 0.0
    %800 = vmatprep.subr.mxu0 0.0
    %801 = vmatpush1.msra.mxu0 0.0
    %802 = vmatprep.subr.mxu0 0.0
    %803 = vmatpush1.msra.mxu0 0.0
    %804 = vmatprep.subr.mxu0 0.0
    %805 = vmatpush1.msra.mxu0 0.0
    %806 = vmatprep.subr.mxu0 0.0
    %807 = vmatpush1.msra.mxu0 0.0
    %808 = vmatprep.subr.mxu0 0.0
    %809 = vmatpush1.msra.mxu0 0.0
    %810 = vmatprep.subr.mxu0 0.0
    %811 = vmatpush1.msra.mxu0 0.0
    %812 = vmatprep.subr.mxu0 0.0
    %813 = vmatpush1.msra.mxu0 0.0
    %814 = vmatprep.subr.mxu0 0.0
    %815 = vmatpush1.msra.mxu0 0.0
    %816 = vmatprep.subr.mxu0 0.0
    %817 = vmatpush1.msra.mxu0 0.0
    %818 = vmatprep.subr.mxu0 0.0
    %819 = vmatpush1.msra.mxu0 0.0
    %820 = vmatprep.subr.mxu0 0.0
    %821 = vmatpush1.msra.mxu0 0.0
    %822 = vmatprep.subr.mxu0 0.0
    %823 = vmatpush1.msra.mxu0 0.0
    %824 = vmatprep.subr.mxu0 0.0
    %825 = vmatpush1.msra.mxu0 0.0
    %826 = vmatprep.mubr.f32.mxu0 0.0
    %827 = vmatmul.mubr.f32.gmra.mrb[0].mxu0 %v760
    %v828 = vpop.f32.mrb[0].mxu0
    %v829 = vadd.f32 0.0, %v828
    %v830 = vpop.f32.mrb[0].mxu0
    %831 = vdwg.mxu0
    %v832 = vadd.f32 %v758, %v829
    %v833 = vxor.u32 %v832, 2147483648
    %v834 = vmul.f32 %v833, 1.442695
    %v835 = vpow.pop %v834
    %v836 = vadd.f32 %v835, 1.0
    %v837 = vrcp.pop %v836
    %v838 = vmul.f32 1.0, %v837
    %v839 = vtanh.pop %v832
    %841 = vrot.lane.b32.xlu0 %v756, 32
    %v842 = vpop.permute.xlu0 %841
    %v844 = vmul.f32 %v838, %v842
    %846 = vrot.lane.b32.xlu0 %v839, 32
    %v847 = vpop.permute.xlu0 %846
    %v849 = vmul.f32 %v838, %v847
    %851 = vrot.lane.b32.xlu0 %v849, 32
    %v852 = vpop.permute.xlu0 %851
    %v854 = vadd.f32 %v844, %v852
    %v855 = vtanh.pop %v854
    %857 = vrot.lane.b32.xlu0 %v855, 32
    %v858 = vpop.permute.xlu0 %857
    %v860 = vmul.f32 %v838, %v858
    %s861 = scalar_lea.vmem [#allocation5], 48
    %v862 = vld [vmem:[%s861] sm:$0xff]
    %vm863 = vcmp.gt.f32.partialorder %v862, 0.0
    %865 = vrot.lane.b32.xlu0 %v860, 64
    %v866 = vpop.permute.xlu0 %865
    %v868 = vsel %vm863, %v866, %v751
    %870 = vrot.lane.b32.xlu0 %v854, 96
    %v871 = vpop.permute.xlu0 %870
    %v873 = vsel %vm863, %v871, %v756
    %s874 = scalar_lea.vmem [#allocation2], 56
    %v875 = vld [vmem:[%s874] sm:$0xff]
    %v877 = vsel %vm61, %v868, 0
    %879 = vmatprep.subr.mxu0 0.0
    %880 = vmatpush1.msra.mxu0 %v56
    %881 = vmatprep.subr.mxu0 0.0
    %882 = vmatpush1.msra.mxu0 %v57
    %883 = vmatprep.subr.mxu0 0.0
    %884 = vmatpush1.msra.mxu0 %v58
    %885 = vmatprep.subr.mxu0 0.0
    %886 = vmatpush1.msra.mxu0 %v59
    %887 = vmatprep.subr.mxu0 0.0
    %888 = vmatpush1.msra.mxu0 0.0
    %889 = vmatprep.subr.mxu0 0.0
    %890 = vmatpush1.msra.mxu0 0.0
    %891 = vmatprep.subr.mxu0 0.0
    %892 = vmatpush1.msra.mxu0 0.0
    %893 = vmatprep.subr.mxu0 0.0
    %894 = vmatpush1.msra.mxu0 0.0
    %895 = vmatprep.subr.mxu0 0.0
    %896 = vmatpush1.msra.mxu0 0.0
    %897 = vmatprep.subr.mxu0 0.0
    %898 = vmatpush1.msra.mxu0 0.0
    %899 = vmatprep.subr.mxu0 0.0
    %900 = vmatpush1.msra.mxu0 0.0
    %901 = vmatprep.subr.mxu0 0.0
    %902 = vmatpush1.msra.mxu0 0.0
    %903 = vmatprep.subr.mxu0 0.0
    %904 = vmatpush1.msra.mxu0 0.0
    %905 = vmatprep.subr.mxu0 0.0
    %906 = vmatpush1.msra.mxu0 0.0
    %907 = vmatprep.subr.mxu0 0.0
    %908 = vmatpush1.msra.mxu0 0.0
    %909 = vmatprep.subr.mxu0 0.0
    %910 = vmatpush1.msra.mxu0 0.0
    %911 = vmatprep.subr.mxu0 0.0
    %912 = vmatpush1.msra.mxu0 0.0
    %913 = vmatprep.subr.mxu0 0.0
    %914 = vmatpush1.msra.mxu0 0.0
    %915 = vmatprep.subr.mxu0 0.0
    %916 = vmatpush1.msra.mxu0 0.0
    %917 = vmatprep.subr.mxu0 0.0
    %918 = vmatpush1.msra.mxu0 0.0
    %919 = vmatprep.subr.mxu0 0.0
    %920 = vmatpush1.msra.mxu0 0.0
    %921 = vmatprep.subr.mxu0 0.0
    %922 = vmatpush1.msra.mxu0 0.0
    %923 = vmatprep.subr.mxu0 0.0
    %924 = vmatpush1.msra.mxu0 0.0
    %925 = vmatprep.subr.mxu0 0.0
    %926 = vmatpush1.msra.mxu0 0.0
    %927 = vmatprep.subr.mxu0 0.0
    %928 = vmatpush1.msra.mxu0 0.0
    %929 = vmatprep.subr.mxu0 0.0
    %930 = vmatpush1.msra.mxu0 0.0
    %931 = vmatprep.subr.mxu0 0.0
    %932 = vmatpush1.msra.mxu0 0.0
    %933 = vmatprep.subr.mxu0 0.0
    %934 = vmatpush1.msra.mxu0 0.0
    %935 = vmatprep.subr.mxu0 0.0
    %936 = vmatpush1.msra.mxu0 0.0
    %937 = vmatprep.subr.mxu0 0.0
    %938 = vmatpush1.msra.mxu0 0.0
    %939 = vmatprep.subr.mxu0 0.0
    %940 = vmatpush1.msra.mxu0 0.0
    %941 = vmatprep.subr.mxu0 0.0
    %942 = vmatpush1.msra.mxu0 0.0
    %943 = vmatprep.mubr.f32.mxu0 0.0
    %944 = vmatmul.mubr.f32.gmra.mrb[0].mxu0 %v877
    %v945 = vpop.f32.mrb[0].mxu0
    %v946 = vadd.f32 0.0, %v945
    %v947 = vpop.f32.mrb[0].mxu0
    %948 = vdwg.mxu0
    %v949 = vadd.f32 %v875, %v946
    %v950 = vxor.u32 %v949, 2147483648
    %v951 = vmul.f32 %v950, 1.442695
    %v952 = vpow.pop %v951
    %v953 = vadd.f32 %v952, 1.0
    %v954 = vrcp.pop %v953
    %v955 = vmul.f32 1.0, %v954
    %v956 = vtanh.pop %v949
    %958 = vrot.lane.b32.xlu0 %v873, 32
    %v959 = vpop.permute.xlu0 %958
    %v961 = vmul.f32 %v955, %v959
    %963 = vrot.lane.b32.xlu0 %v956, 32
    %v964 = vpop.permute.xlu0 %963
    %v966 = vmul.f32 %v955, %v964
    %968 = vrot.lane.b32.xlu0 %v966, 32
    %v969 = vpop.permute.xlu0 %968
    %v971 = vadd.f32 %v961, %v969
    %v972 = vtanh.pop %v971
    %974 = vrot.lane.b32.xlu0 %v972, 32
    %v975 = vpop.permute.xlu0 %974
    %v977 = vmul.f32 %v955, %v975
    %s978 = scalar_lea.vmem [#allocation5], 56
    %v979 = vld [vmem:[%s978] sm:$0xff]
    %vm980 = vcmp.gt.f32.partialorder %v979, 0.0
    %982 = vrot.lane.b32.xlu0 %v977, 64
    %v983 = vpop.permute.xlu0 %982
    %v985 = vsel %vm980, %v983, %v868
    %986 = vst.msk [vmem:[#allocation8] sm:$0xff] %vm61, %v985
    // Predicated region
    $region26: #{tpu_custom_call.1} parent=1 // pred_check
      _
    $region27: #{tpu_custom_call.1} parent=1 // pred_check_branch
      %988 = sbr.rel (0) target = $region29
    $region28: #{tpu_custom_call.1} parent=1 // pred_region
      %s990 = ssub.s32 128, 128
      %991 = vsyncadd [#allocation4], %s990
      %s993 = sshll.u32 [#allocation8], 4
      %s994 = int_to_ptr.vmem [resolvable:$true] %s993
      %996 = dma.vmem_to_hbm [thread:$0]  %s994, 128, %s3, [#allocation4]
    $region29: #{tpu_custom_call.1} parent=1 // pred_fallthru
      _
    // Predicated region
    $region30: #{tpu_custom_call.1} parent=1 // pred_check
      _
    $region31: #{tpu_custom_call.1} parent=1 // pred_check_branch
      %998 = sbr.rel (0) target = $region33
    $region32: #{tpu_custom_call.1} parent=1 // pred_region
      %999 = dma.done [#allocation4], 128
    $region33: #{tpu_custom_call.1} parent=1 // pred_fallthru
      _
    %1000 = vsyncpa [#allocation3], 1
    %1001 = vsyncpa [#allocation6], 1
    %1002 = vsyncpa [#allocation4], 1

</llo_original>
